<compile_context>
chip_gen: v7x
topology: tpu7x:2x2x1
jax: 0.10.0
libtpu: 0.0.40
codegen_flags: <defaults>
</compile_context>

<pallas_src>
import numpy as np
import jax
import jax.numpy as jnp
from jax import lax
from jax.experimental import pallas as pl
from jax.experimental.pallas import tpu as pltpu


# ---------------------------------------------------------------------------
# Kernel 1: batch-invariant point work (MLP + segment mean), runs once.
# ---------------------------------------------------------------------------
def make_points_kernel(kin):
    def kernel(ptx_ref,                 # (N, Ktot) f32   [ptx | src_dirs | zeros(M)]
               s_ref, e_ref,            # (1, Ktot) i32   padded CSR starts / ends
               invc_ref,                # (M, 1)   f32    exact 1/count per segment
               w1_ref, b1_ref,          # (Ktot, Hd) f32, (1, Hd) f32   [W1ab ; tgt_w1]
               w2_ref, b2_ref,          # (Hd, C) f32, (1, C) f32
               seg_ref):                # (M, C)  f32     segment means (output)
        N, Ktot = ptx_ref.shape

        # Membership at the padded width: column (kin + m) is 1 iff point n is in
        # segment m (first `kin` columns are never true by construction).
        n_iota = lax.broadcasted_iota(jnp.int32, (N, Ktot), 0)
        memb = ((n_iota >= s_ref[...]) & (n_iota < e_ref[...])).astype(jnp.float32)

        # Fused first layer: [ptx | src | memb] @ [W1ab ; tgt_w1]
        #   == (ptx|src) @ W1ab  +  gather_csr(tgt_dirs)@W1c   (one K=Ktot MXU dot).
        lhs = (ptx_ref[...] + memb).astype(jnp.bfloat16)
        h = jnp.dot(lhs, w1_ref[...].astype(jnp.bfloat16),
                    preferred_element_type=jnp.float32)                 # (N, Hd)
        h = jnp.maximum(h + b1_ref[...], 0.0)                           # f32 elementwise
        y = jnp.dot(h.astype(jnp.bfloat16), w2_ref[...].astype(jnp.bfloat16),
                    preferred_element_type=jnp.float32) + b2_ref[...]   # (N, C)

        # segment_csr 'mean': memb^T @ y (transposed contraction, exact 0/1 in bf16),
        # then scale by the exact 1/count computed in the wrapper.
        seg_sum = lax.dot_general(memb.astype(jnp.bfloat16), y.astype(jnp.bfloat16),
                                  (((0,), (0,)), ((), ())),
                                  preferred_element_type=jnp.float32)   # (Ktot, C)
        seg_ref[...] = seg_sum[kin:, :] * invc_ref[...]                 # (M, C)

    return kernel


# ---------------------------------------------------------------------------
# Kernel 2: per-batch list_to_map scatter (one-hot matmul) + where-merge.
# ---------------------------------------------------------------------------
def make_scatter_kernel(HW, THW):
    def kernel(pix_ref,                 # (M, 1) i32   flat pixel id per segment
               seg_ref,                 # (M, C) f32   segment means
               x_ref,                   # (1, C, THW) f32   input map block
               xout_ref, mapout_ref):   # (1, C, THW) f32   outputs
        b = pl.program_id(0)
        j = pl.program_id(1)
        M = pix_ref.shape[0]

        col0 = b * HW + j * THW
        hw_iota = lax.broadcasted_iota(jnp.int32, (M, THW), 1)
        # onehot_t[m, p] = 1 iff segment m targets flat pixel (col0 + p).
        # TODO(synk): duplicate pixel ids are SUMMED here (reference scatter is
        #             last-write-wins / unspecified for duplicates).
        onehot_t = (pix_ref[...] == hw_iota + col0).astype(jnp.float32)  # (M, THW)
        mask = jnp.sum(onehot_t, axis=0, keepdims=True)                  # (1, THW)

        # (C, THW) directly (no XLU transpose of the result): seg^T @ onehot_t.
        map_c = lax.dot_general(seg_ref[...].astype(jnp.bfloat16),
                                onehot_t.astype(jnp.bfloat16),
                                (((0,), (0,)), ((), ())),
                                preferred_element_type=jnp.float32)      # (C, THW)

        mapout_ref[0, :, :] = map_c
        xout_ref[0, :, :] = jnp.where(mask > 0.0, map_c, x_ref[0, :, :])

    return kernel


# ---------------------------------------------------------------------------
# Wrapper
# ---------------------------------------------------------------------------
def basedir_forward(x, ptx, point_src_dirs, point_tgt_dirs, point_key, pixel_tgt_idx, params):
    """Pallas BaseDir forward.  Returns (x_merged, ptx_map), both NCHW."""
    f32 = jnp.float32
    bs, C, H, W = x.shape
    HW = H * W
    N, C_pt = ptx.shape
    D = point_src_dirs.shape[1]
    M = pixel_tgt_idx.shape[0]
    Hd = params["b1"].shape[0]
    Kin = C_pt + D
    Ktot = Kin + M

    pix = pixel_tgt_idx.astype(jnp.int32)
    starts = point_key[:-1].astype(jnp.int32)
    ends = point_key[1:].astype(jnp.int32)
    counts = ends - starts

    # Tiny wrapper-side prep (M x D gather + K=3 dot): folded into the combined
    # first-layer weight so neither gather_csr nor the channel concat exist in-kernel.
    w1 = params["w1"].astype(f32)                              # (Kin + D, Hd)
    tgt_sel = point_tgt_dirs.astype(f32)[pix]                  # (M, D)
    tgt_w1 = jnp.dot(tgt_sel, w1[Kin:], precision=lax.Precision.HIGHEST)   # (M, Hd)
    w1_comb = jnp.concatenate([w1[:Kin], tgt_w1], axis=0)      # (Ktot, Hd)

    ptx_pad = jnp.concatenate(
        [ptx.astype(f32), point_src_dirs.astype(f32), jnp.zeros((N, M), f32)], axis=1)
    # First Kin padded columns can never be "in segment" (start=N, end=0).
    s_pad = jnp.concatenate([jnp.full((Kin,), N, jnp.int32), starts]).reshape(1, Ktot)
    e_pad = jnp.concatenate([jnp.zeros((Kin,), jnp.int32), ends]).reshape(1, Ktot)
    inv_counts = (1.0 / jnp.maximum(counts, 1).astype(f32)).reshape(M, 1)

    # ---- Kernel 1: point MLP + segment mean (batch-invariant, runs once). ----
    seg = pl.pallas_call(
        make_points_kernel(Kin),
        grid=(1,),
        in_specs=[
            pl.BlockSpec((N, Ktot), lambda i: (0, 0)),
            pl.BlockSpec((1, Ktot), lambda i: (0, 0)),
            pl.BlockSpec((1, Ktot), lambda i: (0, 0)),
            pl.BlockSpec((M, 1), lambda i: (0, 0)),
            pl.BlockSpec((Ktot, Hd), lambda i: (0, 0)),
            pl.BlockSpec((1, Hd), lambda i: (0, 0)),
            pl.BlockSpec((Hd, C), lambda i: (0, 0)),
            pl.BlockSpec((1, C), lambda i: (0, 0)),
        ],
        out_specs=pl.BlockSpec((M, C), lambda i: (0, 0)),
        out_shape=jax.ShapeDtypeStruct((M, C), f32),
        compiler_params=pltpu.CompilerParams(dimension_semantics=("arbitrary",)),
    )(ptx_pad, s_pad, e_pad, inv_counts, w1_comb,
      params["b1"].astype(f32).reshape(1, Hd),
      params["w2"].astype(f32),
      params["b2"].astype(f32).reshape(1, C))

    # ---- Kernel 2: per-batch scatter + merge (grid over batch x HW blocks). ----
    thw = HW // 2 if (HW % 256 == 0) else HW                   # lane-dense (mult of 128)
    n_hw = HW // thw
    x2d = x.reshape(bs, C, HW).astype(f32)                     # free NCHW-flat reshape
    pix_col = pix.reshape(M, 1)

    x_out2d, map2d = pl.pallas_call(
        make_scatter_kernel(HW, thw),
        grid=(bs, n_hw),
        in_specs=[
            pl.BlockSpec((M, 1), lambda b, j: (0, 0)),
            pl.BlockSpec((M, C), lambda b, j: (0, 0)),
            pl.BlockSpec((1, C, thw), lambda b, j: (b, 0, j)),
        ],
        out_specs=(
            pl.BlockSpec((1, C, thw), lambda b, j: (b, 0, j)),
            pl.BlockSpec((1, C, thw), lambda b, j: (b, 0, j)),
        ),
        out_shape=(jax.ShapeDtypeStruct((bs, C, HW), f32),
                   jax.ShapeDtypeStruct((bs, C, HW), f32)),
        compiler_params=pltpu.CompilerParams(
            dimension_semantics=("parallel", "parallel")),
    )(pix_col, seg, x2d)

    return x_out2d.reshape(bs, C, H, W), map2d.reshape(bs, C, H, W)


# ---------------------------------------------------------------------------
# Pure-JAX f32 reference (correctness check only)
# ---------------------------------------------------------------------------
def basedir_reference(x, ptx, point_src_dirs, point_tgt_dirs, point_key, pixel_tgt_idx, params):
    bs, C, H, W = x.shape
    N = ptx.shape[0]
    M = pixel_tgt_idx.shape[0]
    counts = point_key[1:] - point_key[:-1]
    seg_ids = jnp.repeat(jnp.arange(M), counts, total_repeat_length=N)
    hi = jax.lax.Precision.HIGHEST

    tgt_sel = point_tgt_dirs[pixel_tgt_idx]                  # (M, D)
    tgt_pp = tgt_sel[seg_ids]                                # gather_csr -> (N, D)
    feat = jnp.concatenate([ptx, point_src_dirs, tgt_pp], axis=1)
    h = jnp.maximum(jnp.dot(feat, params["w1"], precision=hi) + params["b1"], 0.0)
    y = jnp.dot(h, params["w2"], precision=hi) + params["b2"]

    seg_sum = jax.ops.segment_sum(y, seg_ids, num_segments=M)
    seg_mean = seg_sum / jnp.maximum(counts, 1)[:, None].astype(jnp.float32)

    P = bs * H * W
    flat = jnp.zeros((P, C), jnp.float32).at[pixel_tgt_idx].set(seg_mean)
    mflat = jnp.zeros((P, 1), jnp.float32).at[pixel_tgt_idx].set(1.0)
    pt_map = flat.reshape(bs, H, W, C).transpose(0, 3, 1, 2)
    mask = mflat.reshape(bs, H, W, 1).transpose(0, 3, 1, 2)
    x_out = jnp.where(mask > 0, pt_map, x)
    return x_out, pt_map


# ---------------------------------------------------------------------------
if __name__ == "__main__":
    bs, H, W = 2, 16, 16
    C_pt, D = 29, 3            # point feature / direction channels (C_pt + D = 32)
    hidden, C = 128, 128       # lane-dense hidden / map channels
    M = 48                     # number of CSR segments (= target pixels)

    counts = 1 + (jnp.arange(M, dtype=jnp.int32) % 4)
    point_key = jnp.concatenate([jnp.zeros((1,), jnp.int32),
                                 jnp.cumsum(counts).astype(jnp.int32)])
    N = int(point_key[-1])                                   # 120 points
    # unique flat pixel ids spread over both batch elements
    pixel_tgt_idx = (jnp.arange(M, dtype=jnp.int32) * 10 + 3) % (bs * H * W)

    key = jax.random.PRNGKey(0)
    ks = jax.random.split(key, 8)
    x = jax.random.normal(ks[0], (bs, C, H, W), jnp.float32)
    ptx = jax.random.normal(ks[1], (N, C_pt), jnp.float32)
    point_src_dirs = jax.random.normal(ks[2], (N, D), jnp.float32)
    point_tgt_dirs = jax.random.normal(ks[3], (bs * H * W, D), jnp.float32)
    params = {
        "w1": 0.1 * jax.random.normal(ks[4], (C_pt + 2 * D, hidden), jnp.float32),
        "b1": 0.1 * jax.random.normal(ks[5], (hidden,), jnp.float32),
        "w2": 0.1 * jax.random.normal(ks[6], (hidden, C), jnp.float32),
        "b2": 0.1 * jax.random.normal(ks[7], (C,), jnp.float32),
    }

    x_out, pt_map = basedir_forward(x, ptx, point_src_dirs, point_tgt_dirs,
                                    point_key, pixel_tgt_idx, params)
    jax.block_until_ready((x_out, pt_map))

    ref_x, ref_map = basedir_reference(x, ptx, point_src_dirs, point_tgt_dirs,
                                       point_key, pixel_tgt_idx, params)
    # tolerance accounts for bf16 MXU inputs (f32 accumulation) in the kernels
    np.testing.assert_allclose(np.asarray(x_out), np.asarray(ref_x), rtol=2e-2, atol=2e-2)
    np.testing.assert_allclose(np.asarray(pt_map), np.asarray(ref_map), rtol=2e-2, atol=2e-2)

    print("KERNEL_OK")
</pallas_src>

<mosaic_0001>
module attributes {stable_mosaic.version = 11 : i64} {
  func.func @kernel(%arg0: i32, %arg1: memref<120x80xf32, #tpu.memory_space<vmem>>, %arg2: memref<1x80xi32, #tpu.memory_space<vmem>>, %arg3: memref<1x80xi32, #tpu.memory_space<vmem>>, %arg4: memref<48x1xf32, #tpu.memory_space<vmem>>, %arg5: memref<80x128xf32, #tpu.memory_space<vmem>>, %arg6: memref<1x128xf32, #tpu.memory_space<vmem>>, %arg7: memref<128x128xf32, #tpu.memory_space<vmem>>, %arg8: memref<1x128xf32, #tpu.memory_space<vmem>>, %arg9: memref<48x128xf32, #tpu.memory_space<vmem>>) attributes {dimension_semantics = [#tpu.dimension_semantics<arbitrary>], iteration_bounds = array<i64: 1>, scalar_prefetch = 0 : i64, scratch_operands = 0 : i64, tpu.core_type = #tpu.core_type<tc>, window_params = [{pipeline_mode = #tpu.pipeline_mode<synchronous>, transform_indices = @transform_0, window_bounds = array<i64: 120, 80>}, {pipeline_mode = #tpu.pipeline_mode<synchronous>, transform_indices = @transform_1, window_bounds = array<i64: 1, 80>}, {pipeline_mode = #tpu.pipeline_mode<synchronous>, transform_indices = @transform_2, window_bounds = array<i64: 1, 80>}, {pipeline_mode = #tpu.pipeline_mode<synchronous>, transform_indices = @transform_3, window_bounds = array<i64: 48, 1>}, {pipeline_mode = #tpu.pipeline_mode<synchronous>, transform_indices = @transform_4, window_bounds = array<i64: 80, 128>}, {pipeline_mode = #tpu.pipeline_mode<synchronous>, transform_indices = @transform_5, window_bounds = array<i64: 1, 128>}, {pipeline_mode = #tpu.pipeline_mode<synchronous>, transform_indices = @transform_6, window_bounds = array<i64: 128, 128>}, {pipeline_mode = #tpu.pipeline_mode<synchronous>, transform_indices = @transform_7, window_bounds = array<i64: 1, 128>}, {pipeline_mode = #tpu.pipeline_mode<synchronous>, transform_indices = @transform_8, window_bounds = array<i64: 48, 128>}]} {
    %0 = tpu.iota {dimensions = array<i32: 0>} : vector<120x80xi32>
    %c0 = arith.constant 0 : index
    %c0_0 = arith.constant 0 : index
    %1 = vector.load %arg2[%c0, %c0_0] : memref<1x80xi32, #tpu.memory_space<vmem>>, vector<1x80xi32>
    %2 = vector.broadcast %1 : vector<1x80xi32> to vector<120x80xi32>
    %3 = arith.cmpi sge, %0, %2 : vector<120x80xi32>
    %c0_1 = arith.constant 0 : index
    %c0_2 = arith.constant 0 : index
    %4 = vector.load %arg3[%c0_1, %c0_2] : memref<1x80xi32, #tpu.memory_space<vmem>>, vector<1x80xi32>
    %5 = vector.broadcast %4 : vector<1x80xi32> to vector<120x80xi32>
    %6 = arith.cmpi slt, %0, %5 : vector<120x80xi32>
    %7 = arith.andi %3, %6 : vector<120x80xi1>
    %8 = arith.extui %7 : vector<120x80xi1> to vector<120x80xi32>
    %9 = arith.sitofp %8 : vector<120x80xi32> to vector<120x80xf32>
    %c0_3 = arith.constant 0 : index
    %c0_4 = arith.constant 0 : index
    %10 = vector.load %arg1[%c0_3, %c0_4] : memref<120x80xf32, #tpu.memory_space<vmem>>, vector<120x80xf32>
    %11 = arith.addf %10, %9 : vector<120x80xf32>
    %12 = arith.truncf %11 : vector<120x80xf32> to vector<120x80xbf16>
    %c0_5 = arith.constant 0 : index
    %c0_6 = arith.constant 0 : index
    %13 = vector.load %arg5[%c0_5, %c0_6] : memref<80x128xf32, #tpu.memory_space<vmem>>, vector<80x128xf32>
    %14 = arith.truncf %13 : vector<80x128xf32> to vector<80x128xbf16>
    %cst = arith.constant dense<0.000000e+00> : vector<120x128xf32>
    %15 = tpu.matmul %12, %14, %cst {dimension_numbers = #tpu.dot_dimension_numbers<[1], [0], [0], [1], [0, 0, 1, 1], [], []>} : vector<120x80xbf16>, vector<80x128xbf16>, vector<120x128xf32> -> vector<120x128xf32>
    %c0_7 = arith.constant 0 : index
    %c0_8 = arith.constant 0 : index
    %16 = vector.load %arg6[%c0_7, %c0_8] : memref<1x128xf32, #tpu.memory_space<vmem>>, vector<1x128xf32>
    %17 = vector.broadcast %16 : vector<1x128xf32> to vector<120x128xf32>
    %18 = arith.addf %15, %17 : vector<120x128xf32>
    %cst_9 = arith.constant 0.000000e+00 : f32
    %19 = vector.broadcast %cst_9 : f32 to vector<120x128xf32>
    %20 = arith.maximumf %18, %19 : vector<120x128xf32>
    %21 = arith.truncf %20 : vector<120x128xf32> to vector<120x128xbf16>
    %c0_10 = arith.constant 0 : index
    %c0_11 = arith.constant 0 : index
    %22 = vector.load %arg7[%c0_10, %c0_11] : memref<128x128xf32, #tpu.memory_space<vmem>>, vector<128x128xf32>
    %23 = arith.truncf %22 : vector<128x128xf32> to vector<128x128xbf16>
    %cst_12 = arith.constant dense<0.000000e+00> : vector<120x128xf32>
    %24 = tpu.matmul %21, %23, %cst_12 {dimension_numbers = #tpu.dot_dimension_numbers<[1], [0], [0], [1], [0, 0, 1, 1], [], []>} : vector<120x128xbf16>, vector<128x128xbf16>, vector<120x128xf32> -> vector<120x128xf32>
    %c0_13 = arith.constant 0 : index
    %c0_14 = arith.constant 0 : index
    %25 = vector.load %arg8[%c0_13, %c0_14] : memref<1x128xf32, #tpu.memory_space<vmem>>, vector<1x128xf32>
    %26 = vector.broadcast %25 : vector<1x128xf32> to vector<120x128xf32>
    %27 = arith.addf %24, %26 : vector<120x128xf32>
    %28 = arith.truncf %9 : vector<120x80xf32> to vector<120x80xbf16>
    %29 = arith.truncf %27 : vector<120x128xf32> to vector<120x128xbf16>
    %cst_15 = arith.constant dense<0.000000e+00> : vector<80x128xf32>
    %30 = tpu.matmul %28, %29, %cst_15 {dimension_numbers = #tpu.dot_dimension_numbers<[0], [0], [1], [1], [0, 1, 1, 1], [], []>} : vector<120x80xbf16>, vector<120x128xbf16>, vector<80x128xf32> -> vector<80x128xf32>
    %31 = vector.extract_strided_slice %30 {offsets = [32, 0], sizes = [48, 128], strides = [1, 1]} : vector<80x128xf32> to vector<48x128xf32>
    %c0_16 = arith.constant 0 : index
    %c0_17 = arith.constant 0 : index
    %32 = vector.load %arg4[%c0_16, %c0_17] : memref<48x1xf32, #tpu.memory_space<vmem>>, vector<48x1xf32>
    %33 = vector.broadcast %32 : vector<48x1xf32> to vector<48x128xf32>
    %34 = arith.mulf %31, %33 : vector<48x128xf32>
    %c0_18 = arith.constant 0 : index
    %c0_19 = arith.constant 0 : index
    %35 = vector.load %arg9[%c0_18, %c0_19] : memref<48x128xf32, #tpu.memory_space<vmem>>, vector<48x128xf32>
    tpu.vector_store %arg9[%c0_18, %c0_19], %34 {strides = array<i32>} : memref<48x128xf32, #tpu.memory_space<vmem>>, vector<48x128xf32>,
    return
  }
  func.func @transform_0(%arg0: i32) -> (i32, i32) {
    %c0_i32 = arith.constant 0 : i32
    %c0_i32_0 = arith.constant 0 : i32
    %c0_i32_1 = arith.constant 0 : i32
    return %c0_i32, %c0_i32_0 : i32, i32
  }
  func.func @transform_1(%arg0: i32) -> (i32, i32) {
    %c0_i32 = arith.constant 0 : i32
    %c0_i32_0 = arith.constant 0 : i32
    %c0_i32_1 = arith.constant 0 : i32
    return %c0_i32, %c0_i32_0 : i32, i32
  }
  func.func @transform_2(%arg0: i32) -> (i32, i32) {
    %c0_i32 = arith.constant 0 : i32
    %c0_i32_0 = arith.constant 0 : i32
    %c0_i32_1 = arith.constant 0 : i32
    return %c0_i32, %c0_i32_0 : i32, i32
  }
  func.func @transform_3(%arg0: i32) -> (i32, i32) {
    %c0_i32 = arith.constant 0 : i32
    %c0_i32_0 = arith.constant 0 : i32
    %c0_i32_1 = arith.constant 0 : i32
    return %c0_i32, %c0_i32_0 : i32, i32
  }
  func.func @transform_4(%arg0: i32) -> (i32, i32) {
    %c0_i32 = arith.constant 0 : i32
    %c0_i32_0 = arith.constant 0 : i32
    %c0_i32_1 = arith.constant 0 : i32
    return %c0_i32, %c0_i32_0 : i32, i32
  }
  func.func @transform_5(%arg0: i32) -> (i32, i32) {
    %c0_i32 = arith.constant 0 : i32
    %c0_i32_0 = arith.constant 0 : i32
    %c0_i32_1 = arith.constant 0 : i32
    return %c0_i32, %c0_i32_0 : i32, i32
  }
  func.func @transform_6(%arg0: i32) -> (i32, i32) {
    %c0_i32 = arith.constant 0 : i32
    %c0_i32_0 = arith.constant 0 : i32
    %c0_i32_1 = arith.constant 0 : i32
    return %c0_i32, %c0_i32_0 : i32, i32
  }
  func.func @transform_7(%arg0: i32) -> (i32, i32) {
    %c0_i32 = arith.constant 0 : i32
    %c0_i32_0 = arith.constant 0 : i32
    %c0_i32_1 = arith.constant 0 : i32
    return %c0_i32, %c0_i32_0 : i32, i32
  }
  func.func @transform_8(%arg0: i32) -> (i32, i32) {
    %c0_i32 = arith.constant 0 : i32
    %c0_i32_0 = arith.constant 0 : i32
    %c0_i32_1 = arith.constant 0 : i32
    return %c0_i32, %c0_i32_0 : i32, i32
  }
}

</mosaic_0001>

<llo_original>
// kernel: tpu_custom_call.1
$region0: #{tpu_custom_call.1}
  #allocation0 [shape = 'u32[]', space=smem, size = 0x4, offset = 0x4, fixed_abs, tag = 'smem constant byte address 0x4 - core index']
  #allocation1 [shape = 'u32[144,128]{1,0:T(1,128)}', space=vmem, size = 0x12000, scoped, tag = 'internal scratch']
  %s0 = inlined_call_operand.vmem [shape: f32[120,80], index: 0, kind: input, shape index: {}]
  %s1 = inlined_call_operand.vmem [shape: s32[1,80], index: 1, kind: input, shape index: {}]
  %s2 = inlined_call_operand.vmem [shape: s32[1,80], index: 2, kind: input, shape index: {}]
  %s3 = inlined_call_operand.vmem [shape: f32[48,1], index: 3, kind: input, shape index: {}]
  %s4 = inlined_call_operand.vmem [shape: f32[80,128], index: 4, kind: input, shape index: {}]
  %s5 = inlined_call_operand.vmem [shape: f32[1,128], index: 5, kind: input, shape index: {}]
  %s6 = inlined_call_operand.vmem [shape: f32[128,128], index: 6, kind: input, shape index: {}]
  %s7 = inlined_call_operand.vmem [shape: f32[1,128], index: 7, kind: input, shape index: {}]
  %s8 = inlined_call_operand.hbm [shape: f32[48,128], index: 8, kind: output, shape index: {}]
  %s9 = sld [smem:[#allocation0]]
  $region42: #{tpu_custom_call.1} parent=0
    _
  %s11 = ssub.s32 1, %s9
  %s12 = scalar_select 0, %s11, %s9
  $region1: #{tpu_custom_call.1} parent=0
    #allocation2 [shape = 'u8[24576]{0}', space=vmem, size = 0x6000, scoped, tag = 'output window, operand 0, single buffered']
    #allocation3 [shape = 's32[1]{0}', space=sflag, size = 0x4, scoped, tag = 'scoped memory for tpu_custom_call.1']
    %13 = vsyncpa [#allocation3], 0
    // Predicated region
    $region2: #{tpu_custom_call.1} parent=1 // pred_check
      _
    $region3: #{tpu_custom_call.1} parent=1 // pred_check_branch
      %15 = sbr.rel (0) target = $region5
    $region4: #{tpu_custom_call.1} parent=1 // pred_region
      _
    $region5: #{tpu_custom_call.1} parent=1 // pred_fallthru
      _
    // Predicated region
    $region6: #{tpu_custom_call.1} parent=1 // pred_check
      _
    $region7: #{tpu_custom_call.1} parent=1 // pred_check_branch
      %17 = sbr.rel (0) target = $region9
    $region8: #{tpu_custom_call.1} parent=1 // pred_region
      _
    $region9: #{tpu_custom_call.1} parent=1 // pred_fallthru
      _
    // Predicated region
    $region10: #{tpu_custom_call.1} parent=1 // pred_check
      _
    $region11: #{tpu_custom_call.1} parent=1 // pred_check_branch
      %19 = sbr.rel (0) target = $region13
    $region12: #{tpu_custom_call.1} parent=1 // pred_region
      _
    $region13: #{tpu_custom_call.1} parent=1 // pred_fallthru
      _
    // Predicated region
    $region14: #{tpu_custom_call.1} parent=1 // pred_check
      _
    $region15: #{tpu_custom_call.1} parent=1 // pred_check_branch
      %21 = sbr.rel (0) target = $region17
    $region16: #{tpu_custom_call.1} parent=1 // pred_region
      _
    $region17: #{tpu_custom_call.1} parent=1 // pred_fallthru
      _
    // Predicated region
    $region18: #{tpu_custom_call.1} parent=1 // pred_check
      _
    $region19: #{tpu_custom_call.1} parent=1 // pred_check_branch
      %23 = sbr.rel (0) target = $region21
    $region20: #{tpu_custom_call.1} parent=1 // pred_region
      _
    $region21: #{tpu_custom_call.1} parent=1 // pred_fallthru
      _
    // Predicated region
    $region22: #{tpu_custom_call.1} parent=1 // pred_check
      _
    $region23: #{tpu_custom_call.1} parent=1 // pred_check_branch
      %25 = sbr.rel (0) target = $region25
    $region24: #{tpu_custom_call.1} parent=1 // pred_region
      _
    $region25: #{tpu_custom_call.1} parent=1 // pred_fallthru
      _
    // Predicated region
    $region26: #{tpu_custom_call.1} parent=1 // pred_check
      _
    $region27: #{tpu_custom_call.1} parent=1 // pred_check_branch
      %27 = sbr.rel (0) target = $region29
    $region28: #{tpu_custom_call.1} parent=1 // pred_region
      _
    $region29: #{tpu_custom_call.1} parent=1 // pred_fallthru
      _
    // Predicated region
    $region30: #{tpu_custom_call.1} parent=1 // pred_check
      _
    $region31: #{tpu_custom_call.1} parent=1 // pred_check_branch
      %29 = sbr.rel (0) target = $region33
    $region32: #{tpu_custom_call.1} parent=1 // pred_region
      _
    $region33: #{tpu_custom_call.1} parent=1 // pred_fallthru
      _
    %v31 = vlaneseq
    %v32 = vshrl.u32 %v31, 7
    %v33 = vadd.s32 %v32, 8
    %v34 = vadd.s32 %v32, 16
    %v35 = vadd.s32 %v32, 24
    %v36 = vadd.s32 %v32, 32
    %v37 = vadd.s32 %v32, 40
    %v38 = vadd.s32 %v32, 48
    %v39 = vadd.s32 %v32, 56
    %v40 = vadd.s32 %v32, 64
    %v41 = vadd.s32 %v32, 72
    %v42 = vadd.s32 %v32, 80
    %v43 = vadd.s32 %v32, 88
    %v44 = vadd.s32 %v32, 96
    %v45 = vadd.s32 %v32, 104
    %v46 = vadd.s32 %v32, 112
    %v47 = vld [vmem:[%s1] sm:$0x1]
    %v48 = vlaneseq
    %v49 = vshrl.u32 %v48, 7
    %v50 = vsub.s32 0, %v49
    %v51 = vrot.slane %v47, %v50
    %vm52 = vcmp.ge.s32.totalorder %v32, %v51
    %vm53 = vcmp.ge.s32.totalorder %v33, %v51
    %vm54 = vcmp.ge.s32.totalorder %v34, %v51
    %vm55 = vcmp.ge.s32.totalorder %v35, %v51
    %vm56 = vcmp.ge.s32.totalorder %v36, %v51
    %vm57 = vcmp.ge.s32.totalorder %v37, %v51
    %vm58 = vcmp.ge.s32.totalorder %v38, %v51
    %vm59 = vcmp.ge.s32.totalorder %v39, %v51
    %vm60 = vcmp.ge.s32.totalorder %v40, %v51
    %vm61 = vcmp.ge.s32.totalorder %v41, %v51
    %vm62 = vcmp.ge.s32.totalorder %v42, %v51
    %vm63 = vcmp.ge.s32.totalorder %v43, %v51
    %vm64 = vcmp.ge.s32.totalorder %v44, %v51
    %vm65 = vcmp.ge.s32.totalorder %v45, %v51
    %vm66 = vcmp.ge.s32.totalorder %v46, %v51
    %v67 = vld [vmem:[%s2] sm:$0x1]
    %v68 = vlaneseq
    %v69 = vshrl.u32 %v68, 7
    %v70 = vsub.s32 0, %v69
    %v71 = vrot.slane %v67, %v70
    %vm72 = vcmp.lt.s32.totalorder %v32, %v71
    %vm73 = vcmp.lt.s32.totalorder %v33, %v71
    %vm74 = vcmp.lt.s32.totalorder %v34, %v71
    %vm75 = vcmp.lt.s32.totalorder %v35, %v71
    %vm76 = vcmp.lt.s32.totalorder %v36, %v71
    %vm77 = vcmp.lt.s32.totalorder %v37, %v71
    %vm78 = vcmp.lt.s32.totalorder %v38, %v71
    %vm79 = vcmp.lt.s32.totalorder %v39, %v71
    %vm80 = vcmp.lt.s32.totalorder %v40, %v71
    %vm81 = vcmp.lt.s32.totalorder %v41, %v71
    %vm82 = vcmp.lt.s32.totalorder %v42, %v71
    %vm83 = vcmp.lt.s32.totalorder %v43, %v71
    %vm84 = vcmp.lt.s32.totalorder %v44, %v71
    %vm85 = vcmp.lt.s32.totalorder %v45, %v71
    %vm86 = vcmp.lt.s32.totalorder %v46, %v71
    %vm87 = vmand %vm52, %vm72
    %vm88 = vmand %vm53, %vm73
    %vm89 = vmand %vm54, %vm74
    %vm90 = vmand %vm55, %vm75
    %vm91 = vmand %vm56, %vm76
    %vm92 = vmand %vm57, %vm77
    %vm93 = vmand %vm58, %vm78
    %vm94 = vmand %vm59, %vm79
    %vm95 = vmand %vm60, %vm80
    %vm96 = vmand %vm61, %vm81
    %vm97 = vmand %vm62, %vm82
    %vm98 = vmand %vm63, %vm83
    %vm99 = vmand %vm64, %vm84
    %vm100 = vmand %vm65, %vm85
    %vm101 = vmand %vm66, %vm86
    %v102 = vsel %vm87, 1, 0
    %v103 = vsel %vm88, 1, 0
    %v104 = vsel %vm89, 1, 0
    %v105 = vsel %vm90, 1, 0
    %v106 = vsel %vm91, 1, 0
    %v107 = vsel %vm92, 1, 0
    %v108 = vsel %vm93, 1, 0
    %v109 = vsel %vm94, 1, 0
    %v110 = vsel %vm95, 1, 0
    %v111 = vsel %vm96, 1, 0
    %v112 = vsel %vm97, 1, 0
    %v113 = vsel %vm98, 1, 0
    %v114 = vsel %vm99, 1, 0
    %v115 = vsel %vm100, 1, 0
    %v116 = vsel %vm101, 1, 0
    %v117 = vcvt.s32.f32 %v102
    %v118 = vcvt.s32.f32 %v103
    %v119 = vcvt.s32.f32 %v104
    %v120 = vcvt.s32.f32 %v105
    %v121 = vcvt.s32.f32 %v106
    %v122 = vcvt.s32.f32 %v107
    %v123 = vcvt.s32.f32 %v108
    %v124 = vcvt.s32.f32 %v109
    %v125 = vcvt.s32.f32 %v110
    %v126 = vcvt.s32.f32 %v111
    %v127 = vcvt.s32.f32 %v112
    %v128 = vcvt.s32.f32 %v113
    %v129 = vcvt.s32.f32 %v114
    %v130 = vcvt.s32.f32 %v115
    %v131 = vcvt.s32.f32 %v116
    %v132 = vld [vmem:[%s0] sm:$0xff]
    %v133 = vld [vmem:[%s0 + $0x8] sm:$0xff]
    %v134 = vld [vmem:[%s0 + $0x10] sm:$0xff]
    %v135 = vld [vmem:[%s0 + $0x18] sm:$0xff]
    %v136 = vld [vmem:[%s0 + $0x20] sm:$0xff]
    %v137 = vld [vmem:[%s0 + $0x28] sm:$0xff]
    %v138 = vld [vmem:[%s0 + $0x30] sm:$0xff]
    %v139 = vld [vmem:[%s0 + $0x38] sm:$0xff]
    %v140 = vld [vmem:[%s0 + $0x40] sm:$0xff]
    %v141 = vld [vmem:[%s0 + $0x48] sm:$0xff]
    %v142 = vld [vmem:[%s0 + $0x50] sm:$0xff]
    %v143 = vld [vmem:[%s0 + $0x58] sm:$0xff]
    %v144 = vld [vmem:[%s0 + $0x60] sm:$0xff]
    %v145 = vld [vmem:[%s0 + $0x68] sm:$0xff]
    %v146 = vld [vmem:[%s0 + $0x70] sm:$0xff]
    %v147 = vadd.f32 %v132, %v117
    %v148 = vadd.f32 %v133, %v118
    %v149 = vadd.f32 %v134, %v119
    %v150 = vadd.f32 %v135, %v120
    %v151 = vadd.f32 %v136, %v121
    %v152 = vadd.f32 %v137, %v122
    %v153 = vadd.f32 %v138, %v123
    %v154 = vadd.f32 %v139, %v124
    %v155 = vadd.f32 %v140, %v125
    %v156 = vadd.f32 %v141, %v126
    %v157 = vadd.f32 %v142, %v127
    %v158 = vadd.f32 %v143, %v128
    %v159 = vadd.f32 %v144, %v129
    %v160 = vadd.f32 %v145, %v130
    %v161 = vadd.f32 %v146, %v131
    %v162 = vpack.c.bf16 %v148, %v147
    %v163 = vpack.c.bf16 %v150, %v149
    %v164 = vpack.c.bf16 %v152, %v151
    %v165 = vpack.c.bf16 %v154, %v153
    %v166 = vpack.c.bf16 %v156, %v155
    %v167 = vpack.c.bf16 %v158, %v157
    %v168 = vpack.c.bf16 %v160, %v159
    %v169 = vpack.c.bf16 %v161, %v161
    %v170 = vld [vmem:[%s4] sm:$0xff]
    %v171 = vld [vmem:[%s4 + $0x8] sm:$0xff]
    %v172 = vld [vmem:[%s4 + $0x10] sm:$0xff]
    %v173 = vld [vmem:[%s4 + $0x18] sm:$0xff]
    %v174 = vld [vmem:[%s4 + $0x20] sm:$0xff]
    %v175 = vld [vmem:[%s4 + $0x28] sm:$0xff]
    %v176 = vld [vmem:[%s4 + $0x30] sm:$0xff]
    %v177 = vld [vmem:[%s4 + $0x38] sm:$0xff]
    %v178 = vld [vmem:[%s4 + $0x40] sm:$0xff]
    %v179 = vld [vmem:[%s4 + $0x48] sm:$0xff]
    %v180 = vpack.c.bf16 %v171, %v170
    %v181 = vpack.c.bf16 %v173, %v172
    %v182 = vpack.c.bf16 %v175, %v174
    %v183 = vpack.c.bf16 %v177, %v176
    %v184 = vpack.c.bf16 %v179, %v178
    %v185 = vld [vmem:[%s5] sm:$0x1]
    %v187 = vlaneseq
    %v188 = vshrl.u32 %v187, 7
    %v189 = vsub.s32 0, %v188
    %v190 = vrot.slane %v185, %v189
    %vm192 = vcmask 654336
    %v194 = vsel %vm192, %v162, 0
    %v197 = vsel %vm192, %v163, 0
    %v200 = vsel %vm192, %v164, 0
    %v203 = vsel %vm192, %v165, 0
    %v206 = vsel %vm192, %v166, 0
    %v209 = vsel %vm192, %v167, 0
    %v212 = vsel %vm192, %v168, 0
    %v215 = vsel %vm192, %v169, 0
    %217 = vmatprep.subr.bf16.mxu0 0
    %218 = vmatpush1.bf16.msra.mxu0 %v180
    %219 = vmatprep.subr.bf16.mxu0 0
    %220 = vmatpush1.bf16.msra.mxu0 %v181
    %221 = vmatprep.subr.bf16.mxu0 0
    %222 = vmatpush1.bf16.msra.mxu0 %v182
    %223 = vmatprep.subr.bf16.mxu0 0
    %224 = vmatpush1.bf16.msra.mxu0 %v183
    %225 = vmatprep.subr.bf16.mxu0 0
    %226 = vmatpush1.bf16.msra.mxu0 %v184
    %227 = vmatprep.subr.bf16.mxu0 0
    %228 = vmatpush1.bf16.msra.mxu0 0
    %229 = vmatprep.subr.bf16.mxu0 0
    %230 = vmatpush1.bf16.msra.mxu0 0
    %231 = vmatprep.subr.bf16.mxu0 0
    %232 = vmatpush1.bf16.msra.mxu0 0
    %233 = vmatprep.subr.bf16.mxu0 0
    %234 = vmatpush1.bf16.msra.mxu0 0
    %235 = vmatprep.subr.bf16.mxu0 0
    %236 = vmatpush1.bf16.msra.mxu0 0
    %237 = vmatprep.subr.bf16.mxu0 0
    %238 = vmatpush1.bf16.msra.mxu0 0
    %239 = vmatprep.subr.bf16.mxu0 0
    %240 = vmatpush1.bf16.msra.mxu0 0
    %241 = vmatprep.subr.bf16.mxu0 0
    %242 = vmatpush1.bf16.msra.mxu0 0
    %243 = vmatprep.subr.bf16.mxu0 0
    %244 = vmatpush1.bf16.msra.mxu0 0
    %245 = vmatprep.subr.bf16.mxu0 0
    %246 = vmatpush1.bf16.msra.mxu0 0
    %247 = vmatprep.subr.bf16.mxu0 0
    %248 = vmatpush1.bf16.msra.mxu0 0
    %249 = vmatprep.mubr.bf16.mxu0 0
    %250 = vmatmul.mubr.bf16.gmra.mrb[0].mxu0 %v194
    %v251 = vpop.f32.mrb[0].mxu0
    %v252 = vadd.f32 %v190, %v251
    %v253 = vpop.f32.mrb[0].mxu0
    %v254 = vpop.f32.mrb[0].mxu0
    %v255 = vadd.f32 %v190, %v254
    %v256 = vpop.f32.mrb[0].mxu0
    %257 = vmatprep.mubr.bf16.mxu0 0
    %258 = vmatmul.mubr.bf16.gmra.mrb[0].mxu0 %v197
    %v259 = vpop.f32.mrb[0].mxu0
    %v260 = vadd.f32 %v190, %v259
    %v261 = vpop.f32.mrb[0].mxu0
    %v262 = vpop.f32.mrb[0].mxu0
    %v263 = vadd.f32 %v190, %v262
    %v264 = vpop.f32.mrb[0].mxu0
    %265 = vmatprep.mubr.bf16.mxu0 0
    %266 = vmatmul.mubr.bf16.gmra.mrb[0].mxu0 %v200
    %v267 = vpop.f32.mrb[0].mxu0
    %v268 = vadd.f32 %v190, %v267
    %v269 = vpop.f32.mrb[0].mxu0
    %v270 = vpop.f32.mrb[0].mxu0
    %v271 = vadd.f32 %v190, %v270
    %v272 = vpop.f32.mrb[0].mxu0
    %273 = vmatprep.mubr.bf16.mxu0 0
    %274 = vmatmul.mubr.bf16.gmra.mrb[0].mxu0 %v203
    %v275 = vpop.f32.mrb[0].mxu0
    %v276 = vadd.f32 %v190, %v275
    %v277 = vpop.f32.mrb[0].mxu0
    %v278 = vpop.f32.mrb[0].mxu0
    %v279 = vadd.f32 %v190, %v278
    %v280 = vpop.f32.mrb[0].mxu0
    %281 = vmatprep.mubr.bf16.mxu0 0
    %282 = vmatmul.mubr.bf16.gmra.mrb[0].mxu0 %v206
    %v283 = vpop.f32.mrb[0].mxu0
    %v284 = vadd.f32 %v190, %v283
    %v285 = vpop.f32.mrb[0].mxu0
    %v286 = vpop.f32.mrb[0].mxu0
    %v287 = vadd.f32 %v190, %v286
    %v288 = vpop.f32.mrb[0].mxu0
    %289 = vmatprep.mubr.bf16.mxu0 0
    %290 = vmatmul.mubr.bf16.gmra.mrb[0].mxu0 %v209
    %v291 = vpop.f32.mrb[0].mxu0
    %v292 = vadd.f32 %v190, %v291
    %v293 = vpop.f32.mrb[0].mxu0
    %v294 = vpop.f32.mrb[0].mxu0
    %v295 = vadd.f32 %v190, %v294
    %v296 = vpop.f32.mrb[0].mxu0
    %297 = vmatprep.mubr.bf16.mxu0 0
    %298 = vmatmul.mubr.bf16.gmra.mrb[0].mxu0 %v212
    %v299 = vpop.f32.mrb[0].mxu0
    %v300 = vadd.f32 %v190, %v299
    %v301 = vpop.f32.mrb[0].mxu0
    %v302 = vpop.f32.mrb[0].mxu0
    %v303 = vadd.f32 %v190, %v302
    %v304 = vpop.f32.mrb[0].mxu0
    %305 = vmatprep.mubr.bf16.mxu0 0
    %306 = vmatmul.mubr.bf16.gmra.mrb[0].mxu0 %v215
    %v307 = vpop.f32.mrb[0].mxu0
    %v308 = vadd.f32 %v190, %v307
    %v309 = vpop.f32.mrb[0].mxu0
    %v310 = vpop.f32.mrb[0].mxu0
    %v311 = vpop.f32.mrb[0].mxu0
    %312 = vdwg.mxu0
    %v313 = vmax.f32 %v252, 0.0
    %v314 = vmax.f32 %v255, 0.0
    %v315 = vmax.f32 %v260, 0.0
    %v316 = vmax.f32 %v263, 0.0
    %v317 = vmax.f32 %v268, 0.0
    %v318 = vmax.f32 %v271, 0.0
    %v319 = vmax.f32 %v276, 0.0
    %v320 = vmax.f32 %v279, 0.0
    %v321 = vmax.f32 %v284, 0.0
    %v322 = vmax.f32 %v287, 0.0
    %v323 = vmax.f32 %v292, 0.0
    %v324 = vmax.f32 %v295, 0.0
    %v325 = vmax.f32 %v300, 0.0
    %v326 = vmax.f32 %v303, 0.0
    %v327 = vmax.f32 %v308, 0.0
    %v328 = vpack.c.bf16 %v314, %v313
    %v329 = vpack.c.bf16 %v316, %v315
    %v330 = vpack.c.bf16 %v318, %v317
    %v331 = vpack.c.bf16 %v320, %v319
    %v332 = vpack.c.bf16 %v322, %v321
    %v333 = vpack.c.bf16 %v324, %v323
    %v334 = vpack.c.bf16 %v326, %v325
    %v335 = vpack.c.bf16 %v327, %v327
    %v336 = vld [vmem:[%s6] sm:$0xff]
    %v337 = vld [vmem:[%s6 + $0x8] sm:$0xff]
    %v338 = vld [vmem:[%s6 + $0x10] sm:$0xff]
    %v339 = vld [vmem:[%s6 + $0x18] sm:$0xff]
    %v340 = vld [vmem:[%s6 + $0x20] sm:$0xff]
    %v341 = vld [vmem:[%s6 + $0x28] sm:$0xff]
    %v342 = vld [vmem:[%s6 + $0x30] sm:$0xff]
    %v343 = vld [vmem:[%s6 + $0x38] sm:$0xff]
    %v344 = vld [vmem:[%s6 + $0x40] sm:$0xff]
    %v345 = vld [vmem:[%s6 + $0x48] sm:$0xff]
    %v346 = vld [vmem:[%s6 + $0x50] sm:$0xff]
    %v347 = vld [vmem:[%s6 + $0x58] sm:$0xff]
    %v348 = vld [vmem:[%s6 + $0x60] sm:$0xff]
    %v349 = vld [vmem:[%s6 + $0x68] sm:$0xff]
    %v350 = vld [vmem:[%s6 + $0x70] sm:$0xff]
    %v351 = vld [vmem:[%s6 + $0x78] sm:$0xff]
    %v352 = vpack.c.bf16 %v337, %v336
    %v353 = vpack.c.bf16 %v339, %v338
    %v354 = vpack.c.bf16 %v341, %v340
    %v355 = vpack.c.bf16 %v343, %v342
    %v356 = vpack.c.bf16 %v345, %v344
    %v357 = vpack.c.bf16 %v347, %v346
    %v358 = vpack.c.bf16 %v349, %v348
    %v359 = vpack.c.bf16 %v351, %v350
    %v360 = vld [vmem:[%s7] sm:$0x1]
    %v362 = vlaneseq
    %v363 = vshrl.u32 %v362, 7
    %v364 = vsub.s32 0, %v363
    %v365 = vrot.slane %v360, %v364
    %367 = vmatprep.subr.bf16.mxu0 0
    %368 = vmatpush1.bf16.msra.mxu0 %v352
    %369 = vmatprep.subr.bf16.mxu0 0
    %370 = vmatpush1.bf16.msra.mxu0 %v353
    %371 = vmatprep.subr.bf16.mxu0 0
    %372 = vmatpush1.bf16.msra.mxu0 %v354
    %373 = vmatprep.subr.bf16.mxu0 0
    %374 = vmatpush1.bf16.msra.mxu0 %v355
    %375 = vmatprep.subr.bf16.mxu0 0
    %376 = vmatpush1.bf16.msra.mxu0 %v356
    %377 = vmatprep.subr.bf16.mxu0 0
    %378 = vmatpush1.bf16.msra.mxu0 %v357
    %379 = vmatprep.subr.bf16.mxu0 0
    %380 = vmatpush1.bf16.msra.mxu0 %v358
    %381 = vmatprep.subr.bf16.mxu0 0
    %382 = vmatpush1.bf16.msra.mxu0 %v359
    %383 = vmatprep.subr.bf16.mxu0 0
    %384 = vmatpush1.bf16.msra.mxu0 0
    %385 = vmatprep.subr.bf16.mxu0 0
    %386 = vmatpush1.bf16.msra.mxu0 0
    %387 = vmatprep.subr.bf16.mxu0 0
    %388 = vmatpush1.bf16.msra.mxu0 0
    %389 = vmatprep.subr.bf16.mxu0 0
    %390 = vmatpush1.bf16.msra.mxu0 0
    %391 = vmatprep.subr.bf16.mxu0 0
    %392 = vmatpush1.bf16.msra.mxu0 0
    %393 = vmatprep.subr.bf16.mxu0 0
    %394 = vmatpush1.bf16.msra.mxu0 0
    %395 = vmatprep.subr.bf16.mxu0 0
    %396 = vmatpush1.bf16.msra.mxu0 0
    %397 = vmatprep.subr.bf16.mxu0 0
    %398 = vmatpush1.bf16.msra.mxu0 0
    %399 = vmatprep.mubr.bf16.mxu0 0
    %400 = vmatmul.mubr.bf16.gmra.mrb[0].mxu0 %v328
    %v401 = vpop.f32.mrb[0].mxu0
    %v402 = vadd.f32 %v365, %v401
    %v403 = vpop.f32.mrb[0].mxu0
    %v404 = vpop.f32.mrb[0].mxu0
    %v405 = vadd.f32 %v365, %v404
    %v406 = vpop.f32.mrb[0].mxu0
    %407 = vmatprep.mubr.bf16.mxu0 0
    %408 = vmatmul.mubr.bf16.gmra.mrb[0].mxu0 %v329
    %v409 = vpop.f32.mrb[0].mxu0
    %v410 = vadd.f32 %v365, %v409
    %v411 = vpop.f32.mrb[0].mxu0
    %v412 = vpop.f32.mrb[0].mxu0
    %v413 = vadd.f32 %v365, %v412
    %v414 = vpop.f32.mrb[0].mxu0
    %415 = vmatprep.mubr.bf16.mxu0 0
    %416 = vmatmul.mubr.bf16.gmra.mrb[0].mxu0 %v330
    %v417 = vpop.f32.mrb[0].mxu0
    %v418 = vadd.f32 %v365, %v417
    %v419 = vpop.f32.mrb[0].mxu0
    %v420 = vpop.f32.mrb[0].mxu0
    %v421 = vadd.f32 %v365, %v420
    %v422 = vpop.f32.mrb[0].mxu0
    %423 = vmatprep.mubr.bf16.mxu0 0
    %424 = vmatmul.mubr.bf16.gmra.mrb[0].mxu0 %v331
    %v425 = vpop.f32.mrb[0].mxu0
    %v426 = vadd.f32 %v365, %v425
    %v427 = vpop.f32.mrb[0].mxu0
    %v428 = vpop.f32.mrb[0].mxu0
    %v429 = vadd.f32 %v365, %v428
    %v430 = vpop.f32.mrb[0].mxu0
    %431 = vmatprep.mubr.bf16.mxu0 0
    %432 = vmatmul.mubr.bf16.gmra.mrb[0].mxu0 %v332
    %v433 = vpop.f32.mrb[0].mxu0
    %v434 = vadd.f32 %v365, %v433
    %v435 = vpop.f32.mrb[0].mxu0
    %v436 = vpop.f32.mrb[0].mxu0
    %v437 = vadd.f32 %v365, %v436
    %v438 = vpop.f32.mrb[0].mxu0
    %439 = vmatprep.mubr.bf16.mxu0 0
    %440 = vmatmul.mubr.bf16.gmra.mrb[0].mxu0 %v333
    %v441 = vpop.f32.mrb[0].mxu0
    %v442 = vadd.f32 %v365, %v441
    %v443 = vpop.f32.mrb[0].mxu0
    %v444 = vpop.f32.mrb[0].mxu0
    %v445 = vadd.f32 %v365, %v444
    %v446 = vpop.f32.mrb[0].mxu0
    %447 = vmatprep.mubr.bf16.mxu0 0
    %448 = vmatmul.mubr.bf16.gmra.mrb[0].mxu0 %v334
    %v449 = vpop.f32.mrb[0].mxu0
    %v450 = vadd.f32 %v365, %v449
    %v451 = vpop.f32.mrb[0].mxu0
    %v452 = vpop.f32.mrb[0].mxu0
    %v453 = vadd.f32 %v365, %v452
    %v454 = vpop.f32.mrb[0].mxu0
    %455 = vmatprep.mubr.bf16.mxu0 0
    %456 = vmatmul.mubr.bf16.gmra.mrb[0].mxu0 %v335
    %v457 = vpop.f32.mrb[0].mxu0
    %v458 = vadd.f32 %v365, %v457
    %v459 = vpop.f32.mrb[0].mxu0
    %v460 = vpop.f32.mrb[0].mxu0
    %v461 = vpop.f32.mrb[0].mxu0
    %462 = vdwg.mxu0
    %v463 = vpack.c.bf16 %v118, %v117
    %v464 = vpack.c.bf16 %v120, %v119
    %v465 = vpack.c.bf16 %v122, %v121
    %v466 = vpack.c.bf16 %v124, %v123
    %v467 = vpack.c.bf16 %v126, %v125
    %v468 = vpack.c.bf16 %v128, %v127
    %v469 = vpack.c.bf16 %v130, %v129
    %v470 = vpack.c.bf16 %v131, %v131
    %v471 = vpack.c.bf16 %v405, %v402
    %v472 = vpack.c.bf16 %v413, %v410
    %v473 = vpack.c.bf16 %v421, %v418
    %v474 = vpack.c.bf16 %v429, %v426
    %v475 = vpack.c.bf16 %v437, %v434
    %v476 = vpack.c.bf16 %v445, %v442
    %v477 = vpack.c.bf16 %v453, %v450
    %v478 = vpack.c.bf16 %v458, %v458
    %479 = vxpose.xlu0.c.b16.start [1/8] %v463, 128
    %480 = vxpose.xlu0.c.b16.cont [2/8] %v464, 128
    %481 = vxpose.xlu0.c.b16.cont [3/8] %v465, 128
    %482 = vxpose.xlu0.c.b16.cont [4/8] %v466, 128
    %483 = vxpose.xlu0.c.b16.cont [5/8] %v467, 128
    %484 = vxpose.xlu0.c.b16.cont [6/8] %v468, 128
    %485 = vxpose.xlu0.c.b16.cont [7/8] %v469, 128
    %486 = vxpose.xlu0.c.b16.end [8/8] %v470, 128
    %v487 = vpop.trf.xlu0
    %v488 = vpop.trf.xlu0
    %v489 = vpop.trf.xlu0
    %v490 = vpop.trf.xlu0
    %v491 = vpop.trf.xlu0
    %v492 = vpop.trf.xlu0
    %v493 = vpop.trf.xlu0
    %v494 = vpop.trf.xlu0
    %vm495 = vcmask 982016
    %v497 = vsel %vm495, %v487, 0
    %v500 = vsel %vm495, %v488, 0
    %v503 = vsel %vm495, %v489, 0
    %v506 = vsel %vm495, %v490, 0
    %v509 = vsel %vm495, %v491, 0
    %vm511 = vcmask 1043456
    %v513 = vsel %vm511, %v478, 0
    %515 = vmatprep.subr.bf16.mxu0 0
    %516 = vmatpush1.bf16.msra.mxu0 %v471
    %517 = vmatprep.subr.bf16.mxu0 0
    %518 = vmatpush1.bf16.msra.mxu0 %v472
    %519 = vmatprep.subr.bf16.mxu0 0
    %520 = vmatpush1.bf16.msra.mxu0 %v473
    %521 = vmatprep.subr.bf16.mxu0 0
    %522 = vmatpush1.bf16.msra.mxu0 %v474
    %523 = vmatprep.subr.bf16.mxu0 0
    %524 = vmatpush1.bf16.msra.mxu0 %v475
    %525 = vmatprep.subr.bf16.mxu0 0
    %526 = vmatpush1.bf16.msra.mxu0 %v476
    %527 = vmatprep.subr.bf16.mxu0 0
    %528 = vmatpush1.bf16.msra.mxu0 %v477
    %529 = vmatprep.subr.bf16.mxu0 0
    %530 = vmatpush1.bf16.msra.mxu0 %v513
    %531 = vmatprep.subr.bf16.mxu0 0
    %532 = vmatpush1.bf16.msra.mxu0 0
    %533 = vmatprep.subr.bf16.mxu0 0
    %534 = vmatpush1.bf16.msra.mxu0 0
    %535 = vmatprep.subr.bf16.mxu0 0
    %536 = vmatpush1.bf16.msra.mxu0 0
    %537 = vmatprep.subr.bf16.mxu0 0
    %538 = vmatpush1.bf16.msra.mxu0 0
    %539 = vmatprep.subr.bf16.mxu0 0
    %540 = vmatpush1.bf16.msra.mxu0 0
    %541 = vmatprep.subr.bf16.mxu0 0
    %542 = vmatpush1.bf16.msra.mxu0 0
    %543 = vmatprep.subr.bf16.mxu0 0
    %544 = vmatpush1.bf16.msra.mxu0 0
    %545 = vmatprep.subr.bf16.mxu0 0
    %546 = vmatpush1.bf16.msra.mxu0 0
    %547 = vmatprep.mubr.bf16.mxu0 0
    %548 = vmatmul.mubr.bf16.gmra.mrb[0].mxu0 %v497
    %v549 = vpop.f32.mrb[0].mxu0
    %v550 = vpop.f32.mrb[0].mxu0
    %v551 = vpop.f32.mrb[0].mxu0
    %v552 = vpop.f32.mrb[0].mxu0
    %553 = vmatprep.mubr.bf16.mxu0 0
    %554 = vmatmul.mubr.bf16.gmra.mrb[0].mxu0 %v500
    %v555 = vpop.f32.mrb[0].mxu0
    %v556 = vpop.f32.mrb[0].mxu0
    %v557 = vpop.f32.mrb[0].mxu0
    %v558 = vpop.f32.mrb[0].mxu0
    %559 = vmatprep.mubr.bf16.mxu0 0
    %560 = vmatmul.mubr.bf16.gmra.mrb[0].mxu0 %v503
    %v561 = vpop.f32.mrb[0].mxu0
    %v562 = vadd.f32 0.0, %v561
    %v563 = vpop.f32.mrb[0].mxu0
    %v564 = vpop.f32.mrb[0].mxu0
    %v565 = vadd.f32 0.0, %v564
    %v566 = vpop.f32.mrb[0].mxu0
    %567 = vmatprep.mubr.bf16.mxu0 0
    %568 = vmatmul.mubr.bf16.gmra.mrb[0].mxu0 %v506
    %v569 = vpop.f32.mrb[0].mxu0
    %v570 = vadd.f32 0.0, %v569
    %v571 = vpop.f32.mrb[0].mxu0
    %v572 = vpop.f32.mrb[0].mxu0
    %v573 = vadd.f32 0.0, %v572
    %v574 = vpop.f32.mrb[0].mxu0
    %575 = vmatprep.mubr.bf16.mxu0 0
    %576 = vmatmul.mubr.bf16.gmra.mrb[0].mxu0 %v509
    %v577 = vpop.f32.mrb[0].mxu0
    %v578 = vadd.f32 0.0, %v577
    %v579 = vpop.f32.mrb[0].mxu0
    %v580 = vpop.f32.mrb[0].mxu0
    %v581 = vadd.f32 0.0, %v580
    %v582 = vpop.f32.mrb[0].mxu0
    %583 = vdwg.mxu0
    %v584 = vld [vmem:[%s3] sm:$0xff]
    %v585 = vld [vmem:[%s3 + $0x8] sm:$0xff]
    %v586 = vld [vmem:[%s3 + $0x10] sm:$0xff]
    %v587 = vld [vmem:[%s3 + $0x18] sm:$0xff]
    %v588 = vld [vmem:[%s3 + $0x20] sm:$0xff]
    %v589 = vld [vmem:[%s3 + $0x28] sm:$0xff]
    %591 = vset.pattern.permute.xlu0 0
    %592 = vperm.xlu0 %591, %v584
    %v593 = vpop.permute.xlu0 %592
    %596 = vset.pattern.permute.xlu0 0
    %597 = vperm.xlu0 %596, %v585
    %v598 = vpop.permute.xlu0 %597
    %601 = vset.pattern.permute.xlu0 0
    %602 = vperm.xlu0 %601, %v586
    %v603 = vpop.permute.xlu0 %602
    %606 = vset.pattern.permute.xlu0 0
    %607 = vperm.xlu0 %606, %v587
    %v608 = vpop.permute.xlu0 %607
    %611 = vset.pattern.permute.xlu0 0
    %612 = vperm.xlu0 %611, %v588
    %v613 = vpop.permute.xlu0 %612
    %616 = vset.pattern.permute.xlu0 0
    %617 = vperm.xlu0 %616, %v589
    %v618 = vpop.permute.xlu0 %617
    %v620 = vmul.f32 %v562, %v593
    %v621 = vmul.f32 %v565, %v598
    %v622 = vmul.f32 %v570, %v603
    %v623 = vmul.f32 %v573, %v608
    %v624 = vmul.f32 %v578, %v613
    %v625 = vmul.f32 %v581, %v618
    %626 = vst [vmem:[#allocation2] sm:$0xff] %v620
    %627 = vst [vmem:[#allocation2 + $0x8] sm:$0xff] %v621
    %628 = vst [vmem:[#allocation2 + $0x10] sm:$0xff] %v622
    %629 = vst [vmem:[#allocation2 + $0x18] sm:$0xff] %v623
    %630 = vst [vmem:[#allocation2 + $0x20] sm:$0xff] %v624
    %631 = vst [vmem:[#allocation2 + $0x28] sm:$0xff] %v625
    // Predicated region
    $region34: #{tpu_custom_call.1} parent=1 // pred_check
      _
    $region35: #{tpu_custom_call.1} parent=1 // pred_check_branch
      %633 = sbr.rel (0) target = $region37
    $region36: #{tpu_custom_call.1} parent=1 // pred_region
      %s635 = ssub.s32 768, 768
      %636 = vsyncadd [#allocation3], %s635
      %s637 = sshll.u32 [#allocation2], 4
      %s638 = int_to_ptr.vmem [resolvable:$true] %s637
      %643 = dma.vmem_to_hbm [thread:$0]  %s638, 768, %s8, [#allocation3], 128, 128, 8
    $region37: #{tpu_custom_call.1} parent=1 // pred_fallthru
      _
    // Predicated region
    $region38: #{tpu_custom_call.1} parent=1 // pred_check
      _
    $region39: #{tpu_custom_call.1} parent=1 // pred_check_branch
      %645 = sbr.rel (0) target = $region41
    $region40: #{tpu_custom_call.1} parent=1 // pred_region
      %646 = dma.done [#allocation3], 768
    $region41: #{tpu_custom_call.1} parent=1 // pred_fallthru
      _
    %647 = vsyncpa [#allocation3], 1

</llo_original>
